<compile_context>
chip_gen: v6e
topology: v6e:2x2x1
jax: 0.10.0
libtpu: 0.0.40
codegen_flags: <defaults>
</compile_context>

<pallas_src>
import jax
import jax.numpy as jnp
from jax import lax
from jax.experimental import pallas as pl
from jax.experimental.pallas import tpu as pltpu

_NEG_BIG = -1e30  # finite additive mask bias (avoids the -inf -> NaN softmax path)


def _attention_kernel(x_ref, wq_ref, wk_ref, wv_ref, wproj_ref, bproj_ref,
                      mrow_ref, mcol_ref, out_ref, attn_ref, bias_scr):
    # Per grid step (b, h):
    #   x_ref:     (1, N, C)  bf16         wq/wk/wv_ref: (1, C, hd) bf16
    #   wproj_ref: (1, hd, C) bf16         bproj_ref:    (1, C)     f32
    #   mrow_ref:  (1, 1, N)  f32          mcol_ref:     (1, N, 1)  f32
    #   out_ref:   (1, N, C)  f32  (resident/accumulated across the h axis)
    #   attn_ref:  (1, 1, N, N) f32        bias_scr:     (N, N)     f32 scratch
    h = pl.program_id(1)

    # Build the additive mask bias once per batch element and reuse for every
    # head (turns H compare+select passes into a single add per head).
    @pl.when(h == 0)
    def _build_bias():
        pair = mcol_ref[0] * mrow_ref[0]              # (N, N); pad_mask assumed {0,1}
        bias_scr[...] = jnp.where(pair == 0.0, _NEG_BIG, 0.0)

    x = x_ref[0]                                      # (N, C) bf16
    # Per-head projections: full-C contraction on the MXU, bf16 in / f32 acc.
    # scale / temperature is already folded into wq on the host side.
    q = jnp.dot(x, wq_ref[0], preferred_element_type=jnp.float32)   # (N, hd)
    k = jnp.dot(x, wk_ref[0], preferred_element_type=jnp.float32)   # (N, hd)
    v = jnp.dot(x, wv_ref[0], preferred_element_type=jnp.float32)   # (N, hd)

    # scores = q @ k^T without materializing a transpose.
    s = lax.dot_general(q.astype(jnp.bfloat16), k.astype(jnp.bfloat16),
                        (((1,), (1,)), ((), ())),
                        preferred_element_type=jnp.float32)          # (N, N)
    s = s + bias_scr[...]

    # Softmax in f32.  Masked keys underflow exp() to exactly 0; fully-masked
    # query rows are zeroed by the row mask (replaces the nan_to_num fixup).
    s_max = jnp.max(s, axis=-1, keepdims=True)
    e = jnp.exp(s - s_max)
    denom = jnp.sum(e, axis=-1, keepdims=True)
    a = e * pl.reciprocal(denom, approx=True)         # EUP, not a VALU divide
    a = a * mcol_ref[0]                               # (N, N) * (N, 1)

    attn_ref[0, 0] = a                                # streamed per-head store
    # TODO(synk): at toy N=8 the attn last dim is < 128 lanes (masked stores);
    # for real N (>=128) this store is lane-dense, otherwise flatten the out_spec.

    o_h = jnp.dot(a.astype(jnp.bfloat16), v.astype(jnp.bfloat16),
                  preferred_element_type=jnp.float32)                # (N, hd)
    contrib = jnp.dot(o_h.astype(jnp.bfloat16), wproj_ref[0],
                      preferred_element_type=jnp.float32)            # (N, C)

    # out = sum_h o_h @ Wproj[h] + b  — accumulate into the resident block.
    @pl.when(h == 0)
    def _init_out():
        out_ref[0] = bproj_ref[...] + contrib         # (1, C) broadcasts over N

    @pl.when(h != 0)
    def _acc_out():
        out_ref[0] = out_ref[0] + contrib
    # TODO(synk): attn_drop / proj_drop have p=0.0 (identity); dropout not emitted.
    # TODO(synk): for realistic N, tile the key axis flash-style so the (N, N)
    # attention tile fits v7x's 64 MiB VMEM (it is fine on v5e/v6e far longer).


def attention_forward(x, temperature, pad_mask, wqkv, wproj, bproj, num_heads):
    """x: (B, N, C); pad_mask: (B, N, 1); wqkv: (3C, C); wproj: (C, C); bproj: (C,)."""
    B, N, C = x.shape
    H = num_heads
    hd = C // H
    scale = float(hd) ** -0.5

    # PyTorch Linear weights are (out, in); transpose to (in, out) so the kernel
    # computes y = x @ W directly on the MXU, then split per head on the host.
    wqkv_t = wqkv.T.astype(jnp.float32)               # (C, 3C)
    wq_t = wqkv_t[:, 0:C] * (scale / jnp.asarray(temperature, jnp.float32))
    wk_t = wqkv_t[:, C:2 * C]
    wv_t = wqkv_t[:, 2 * C:3 * C]

    def per_head_cols(w):                             # (C, C) -> (H, C, hd)
        return w.reshape(C, H, hd).transpose(1, 0, 2)

    wq_h = per_head_cols(wq_t).astype(jnp.bfloat16)
    wk_h = per_head_cols(wk_t).astype(jnp.bfloat16)
    wv_h = per_head_cols(wv_t).astype(jnp.bfloat16)
    wproj_h = wproj.T.astype(jnp.float32).reshape(H, hd, C).astype(jnp.bfloat16)

    bproj2 = bproj.reshape(1, C).astype(jnp.float32)
    m = pad_mask.reshape(B, N).astype(jnp.float32)    # assumed binary {0, 1}
    mask_row = m.reshape(B, 1, N)
    mask_col = m.reshape(B, N, 1)
    x_bf = x.astype(jnp.bfloat16)

    grid_spec = pltpu.PrefetchScalarGridSpec(
        num_scalar_prefetch=0,
        grid=(B, H),
        in_specs=[
            pl.BlockSpec((1, N, C), lambda b, h: (b, 0, 0)),        # x
            pl.BlockSpec((1, C, hd), lambda b, h: (h, 0, 0)),       # Wq (pre-scaled)
            pl.BlockSpec((1, C, hd), lambda b, h: (h, 0, 0)),       # Wk
            pl.BlockSpec((1, C, hd), lambda b, h: (h, 0, 0)),       # Wv
            pl.BlockSpec((1, hd, C), lambda b, h: (h, 0, 0)),       # Wproj rows of head h
            pl.BlockSpec((1, C), lambda b, h: (0, 0)),              # proj bias
            pl.BlockSpec((1, 1, N), lambda b, h: (b, 0, 0)),        # mask (row layout)
            pl.BlockSpec((1, N, 1), lambda b, h: (b, 0, 0)),        # mask (col layout)
        ],
        out_specs=[
            pl.BlockSpec((1, N, C), lambda b, h: (b, 0, 0)),        # out (acc over h)
            pl.BlockSpec((1, 1, N, N), lambda b, h: (b, h, 0, 0)),  # attn probabilities
        ],
        scratch_shapes=[pltpu.VMEM((N, N), jnp.float32)],
    )

    out, attn = pl.pallas_call(
        _attention_kernel,
        out_shape=(
            jax.ShapeDtypeStruct((B, N, C), jnp.float32),
            jax.ShapeDtypeStruct((B, H, N, N), jnp.float32),
        ),
        grid_spec=grid_spec,
        compiler_params=pltpu.CompilerParams(
            dimension_semantics=("parallel", "arbitrary")),
    )(x_bf, wq_h, wk_h, wv_h, wproj_h, bproj2, mask_row, mask_col)
    return out, attn


def _reference(x, temperature, pad_mask, wqkv, wproj, bproj, H):
    """Pure-JAX (f32) mirror of the PyTorch forward, for correctness checking."""
    B, N, C = x.shape
    hd = C // H
    qkv = x @ wqkv.T                                               # (B, N, 3C)
    qkv = qkv.reshape(B, N, 3, H, hd).transpose(2, 0, 3, 1, 4)     # (3, B, H, N, hd)
    q, k, v = qkv[0], qkv[1], qkv[2]
    attn = jnp.einsum('bhqd,bhkd->bhqk', q, k) * (hd ** -0.5) / temperature
    m = pad_mask.squeeze(-1)                                       # (B, N)
    expanded = m[:, None, :, None] * m[:, None, None, :]           # (B, 1, N, N)
    attn = jnp.where(expanded == 0, -jnp.inf, attn)
    s_max = jnp.max(attn, axis=-1, keepdims=True)
    e = jnp.exp(attn - s_max)
    attn = e / jnp.sum(e, axis=-1, keepdims=True)
    attn = jnp.where(jnp.isnan(attn), 0.0, attn)
    out = jnp.einsum('bhqk,bhkd->bhqd', attn, v).transpose(0, 2, 1, 3).reshape(B, N, C)
    out = out @ wproj.T + bproj
    return out, attn


if __name__ == "__main__":
    B, N, C, H = 2, 8, 32, 4
    key = jax.random.PRNGKey(0)
    kx, kq, kp, kb = jax.random.split(key, 4)
    x = jax.random.normal(kx, (B, N, C), jnp.float32)
    wqkv = jax.random.normal(kq, (3 * C, C), jnp.float32) * 0.05    # nn.Linear(dim, 3*dim, bias=False)
    wproj = jax.random.normal(kp, (C, C), jnp.float32) * 0.05       # nn.Linear(dim, dim)
    bproj = jax.random.normal(kb, (C,), jnp.float32) * 0.05
    temperature = 1.5
    pad_mask = jnp.ones((B, N, 1), jnp.float32)
    pad_mask = pad_mask.at[1, N - 3:, 0].set(0.0)                   # mask last 3 tokens of batch 1

    out, attn = attention_forward(x, temperature, pad_mask, wqkv, wproj, bproj, H)
    jax.block_until_ready((out, attn))

    ref_out, ref_attn = _reference(x, temperature, pad_mask, wqkv, wproj, bproj, H)
    assert out.shape == (B, N, C) and attn.shape == (B, H, N, N)
    # bf16 MXU operands + approximate reciprocal vs an all-f32 reference.
    assert jnp.allclose(attn, ref_attn, atol=3e-3, rtol=3e-3), "attn mismatch"
    assert jnp.allclose(out, ref_out, atol=2e-2, rtol=2e-2), "output mismatch"
    print("KERNEL_OK")
</pallas_src>

<mosaic_0001>
module attributes {stable_mosaic.version = 11 : i64} {
  func.func @_attention_kernel(%arg0: i32, %arg1: i32, %arg2: memref<1x8x32xbf16, #tpu.memory_space<vmem>>, %arg3: memref<1x32x8xbf16, #tpu.memory_space<vmem>>, %arg4: memref<1x32x8xbf16, #tpu.memory_space<vmem>>, %arg5: memref<1x32x8xbf16, #tpu.memory_space<vmem>>, %arg6: memref<1x8x32xbf16, #tpu.memory_space<vmem>>, %arg7: memref<1x32xf32, #tpu.memory_space<vmem>>, %arg8: memref<1x1x8xf32, #tpu.memory_space<vmem>>, %arg9: memref<1x8x1xf32, #tpu.memory_space<vmem>>, %arg10: memref<1x8x32xf32, #tpu.memory_space<vmem>>, %arg11: memref<1x1x8x8xf32, #tpu.memory_space<vmem>>, %arg12: memref<8x8xf32, #tpu.memory_space<vmem>>) attributes {dimension_semantics = [#tpu.dimension_semantics<parallel>, #tpu.dimension_semantics<arbitrary>], iteration_bounds = array<i64: 2, 4>, scalar_prefetch = 0 : i64, scratch_operands = 1 : i64, tpu.core_type = #tpu.core_type<tc>, window_params = [{transform_indices = @transform_0, window_bounds = array<i64: 1, 8, 32>}, {transform_indices = @transform_1, window_bounds = array<i64: 1, 32, 8>}, {transform_indices = @transform_2, window_bounds = array<i64: 1, 32, 8>}, {transform_indices = @transform_3, window_bounds = array<i64: 1, 32, 8>}, {transform_indices = @transform_4, window_bounds = array<i64: 1, 8, 32>}, {pipeline_mode = #tpu.pipeline_mode<synchronous>, transform_indices = @transform_5, window_bounds = array<i64: 1, 32>}, {transform_indices = @transform_6, window_bounds = array<i64: 1, 1, 8>}, {transform_indices = @transform_7, window_bounds = array<i64: 1, 8, 1>}, {transform_indices = @transform_8, window_bounds = array<i64: 1, 8, 32>}, {transform_indices = @transform_9, window_bounds = array<i64: 1, 1, 8, 8>}]} {
    %c0_i32 = arith.constant 0 : i32
    %0 = arith.cmpi eq, %arg1, %c0_i32 : i32
    %1 = arith.extui %0 : i1 to i32
    %c0_i32_0 = arith.constant 0 : i32
    %2 = arith.cmpi ne, %1, %c0_i32_0 : i32
    scf.if %2 {
      %c0_35 = arith.constant 0 : index
      %c0_36 = arith.constant 0 : index
      %c0_37 = arith.constant 0 : index
      %49 = vector.load %arg9[%c0_35, %c0_36, %c0_37] : memref<1x8x1xf32, #tpu.memory_space<vmem>>, vector<1x8x1xf32>
      %50 = vector.shape_cast %49 : vector<1x8x1xf32> to vector<8x1xf32>
      %c0_38 = arith.constant 0 : index
      %c0_39 = arith.constant 0 : index
      %c0_40 = arith.constant 0 : index
      %51 = vector.load %arg8[%c0_38, %c0_39, %c0_40] : memref<1x1x8xf32, #tpu.memory_space<vmem>>, vector<1x1x8xf32>
      %52 = vector.shape_cast %51 : vector<1x1x8xf32> to vector<1x8xf32>
      %53 = vector.broadcast %50 : vector<8x1xf32> to vector<8x8xf32>
      %54 = vector.broadcast %52 : vector<1x8xf32> to vector<8x8xf32>
      %55 = arith.mulf %53, %54 : vector<8x8xf32>
      %cst_41 = arith.constant 0.000000e+00 : f32
      %56 = vector.broadcast %cst_41 : f32 to vector<8x8xf32>
      %57 = arith.cmpf oeq, %55, %56 : vector<8x8xf32>
      %cst_42 = arith.constant -1.000000e+30 : f32
      %cst_43 = arith.constant 0.000000e+00 : f32
      %58 = vector.broadcast %cst_42 : f32 to vector<8x8xf32>
      %59 = vector.broadcast %cst_43 : f32 to vector<8x8xf32>
      %60 = arith.select %57, %58, %59 : vector<8x8xi1>, vector<8x8xf32>
      %c0_44 = arith.constant 0 : index
      %c0_45 = arith.constant 0 : index
      %61 = vector.load %arg12[%c0_44, %c0_45] : memref<8x8xf32, #tpu.memory_space<vmem>>, vector<8x8xf32>
      tpu.vector_store %arg12[%c0_44, %c0_45], %60 {strides = array<i32>} : memref<8x8xf32, #tpu.memory_space<vmem>>, vector<8x8xf32>,
    } else {
    }
    %c0 = arith.constant 0 : index
    %c0_1 = arith.constant 0 : index
    %c0_2 = arith.constant 0 : index
    %3 = vector.load %arg2[%c0, %c0_1, %c0_2] : memref<1x8x32xbf16, #tpu.memory_space<vmem>>, vector<1x8x32xbf16>
    %4 = vector.shape_cast %3 : vector<1x8x32xbf16> to vector<8x32xbf16>
    %c0_3 = arith.constant 0 : index
    %c0_4 = arith.constant 0 : index
    %c0_5 = arith.constant 0 : index
    %5 = vector.load %arg3[%c0_3, %c0_4, %c0_5] : memref<1x32x8xbf16, #tpu.memory_space<vmem>>, vector<1x32x8xbf16>
    %6 = vector.shape_cast %5 : vector<1x32x8xbf16> to vector<32x8xbf16>
    %cst = arith.constant dense<0.000000e+00> : vector<8x8xf32>
    %7 = tpu.matmul %4, %6, %cst {dimension_numbers = #tpu.dot_dimension_numbers<[1], [0], [0], [1], [0, 0, 1, 1], [], []>} : vector<8x32xbf16>, vector<32x8xbf16>, vector<8x8xf32> -> vector<8x8xf32>
    %c0_6 = arith.constant 0 : index
    %c0_7 = arith.constant 0 : index
    %c0_8 = arith.constant 0 : index
    %8 = vector.load %arg4[%c0_6, %c0_7, %c0_8] : memref<1x32x8xbf16, #tpu.memory_space<vmem>>, vector<1x32x8xbf16>
    %9 = vector.shape_cast %8 : vector<1x32x8xbf16> to vector<32x8xbf16>
    %cst_9 = arith.constant dense<0.000000e+00> : vector<8x8xf32>
    %10 = tpu.matmul %4, %9, %cst_9 {dimension_numbers = #tpu.dot_dimension_numbers<[1], [0], [0], [1], [0, 0, 1, 1], [], []>} : vector<8x32xbf16>, vector<32x8xbf16>, vector<8x8xf32> -> vector<8x8xf32>
    %c0_10 = arith.constant 0 : index
    %c0_11 = arith.constant 0 : index
    %c0_12 = arith.constant 0 : index
    %11 = vector.load %arg5[%c0_10, %c0_11, %c0_12] : memref<1x32x8xbf16, #tpu.memory_space<vmem>>, vector<1x32x8xbf16>
    %12 = vector.shape_cast %11 : vector<1x32x8xbf16> to vector<32x8xbf16>
    %cst_13 = arith.constant dense<0.000000e+00> : vector<8x8xf32>
    %13 = tpu.matmul %4, %12, %cst_13 {dimension_numbers = #tpu.dot_dimension_numbers<[1], [0], [0], [1], [0, 0, 1, 1], [], []>} : vector<8x32xbf16>, vector<32x8xbf16>, vector<8x8xf32> -> vector<8x8xf32>
    %14 = arith.truncf %7 : vector<8x8xf32> to vector<8x8xbf16>
    %15 = arith.truncf %10 : vector<8x8xf32> to vector<8x8xbf16>
    %cst_14 = arith.constant dense<0.000000e+00> : vector<8x8xf32>
    %16 = tpu.matmul %14, %15, %cst_14 {dimension_numbers = #tpu.dot_dimension_numbers<[1], [1], [0], [0], [0, 0, 1, 0], [], []>} : vector<8x8xbf16>, vector<8x8xbf16>, vector<8x8xf32> -> vector<8x8xf32>
    %c0_15 = arith.constant 0 : index
    %c0_16 = arith.constant 0 : index
    %17 = vector.load %arg12[%c0_15, %c0_16] : memref<8x8xf32, #tpu.memory_space<vmem>>, vector<8x8xf32>
    %18 = arith.addf %16, %17 : vector<8x8xf32>
    %cst_17 = arith.constant dense<0xFF800000> : vector<8xf32>
    %19 = vector.multi_reduction <maximumf>, %18, %cst_17 [1] : vector<8x8xf32> to vector<8xf32>
    %20 = vector.shape_cast %19 : vector<8xf32> to vector<8x1xf32>
    %21 = vector.broadcast %20 : vector<8x1xf32> to vector<8x8xf32>
    %22 = arith.subf %18, %21 : vector<8x8xf32>
    %23 = math.exp %22 : vector<8x8xf32>
    %cst_18 = arith.constant dense<0.000000e+00> : vector<8xf32>
    %24 = vector.multi_reduction <add>, %23, %cst_18 [1] : vector<8x8xf32> to vector<8xf32>
    %25 = vector.shape_cast %24 : vector<8xf32> to vector<8x1xf32>
    %26 = tpu.reciprocal %25 {approx = true} : vector<8x1xf32> -> vector<8x1xf32>
    %27 = vector.broadcast %26 : vector<8x1xf32> to vector<8x8xf32>
    %28 = arith.mulf %23, %27 : vector<8x8xf32>
    %c0_19 = arith.constant 0 : index
    %c0_20 = arith.constant 0 : index
    %c0_21 = arith.constant 0 : index
    %29 = vector.load %arg9[%c0_19, %c0_20, %c0_21] : memref<1x8x1xf32, #tpu.memory_space<vmem>>, vector<1x8x1xf32>
    %30 = vector.shape_cast %29 : vector<1x8x1xf32> to vector<8x1xf32>
    %31 = vector.broadcast %30 : vector<8x1xf32> to vector<8x8xf32>
    %32 = arith.mulf %28, %31 : vector<8x8xf32>
    %c0_22 = arith.constant 0 : index
    %c0_23 = arith.constant 0 : index
    %c0_24 = arith.constant 0 : index
    %c0_25 = arith.constant 0 : index
    %33 = vector.load %arg11[%c0_22, %c0_23, %c0_24, %c0_25] : memref<1x1x8x8xf32, #tpu.memory_space<vmem>>, vector<1x1x8x8xf32>
    %34 = vector.shape_cast %33 : vector<1x1x8x8xf32> to vector<8x8xf32>
    %35 = vector.shape_cast %32 : vector<8x8xf32> to vector<1x1x8x8xf32>
    tpu.vector_store %arg11[%c0_22, %c0_23, %c0_24, %c0_25], %35 {strides = array<i32>} : memref<1x1x8x8xf32, #tpu.memory_space<vmem>>, vector<1x1x8x8xf32>,
    %36 = arith.truncf %32 : vector<8x8xf32> to vector<8x8xbf16>
    %37 = arith.truncf %13 : vector<8x8xf32> to vector<8x8xbf16>
    %cst_26 = arith.constant dense<0.000000e+00> : vector<8x8xf32>
    %38 = tpu.matmul %36, %37, %cst_26 {dimension_numbers = #tpu.dot_dimension_numbers<[1], [0], [0], [1], [0, 0, 1, 1], [], []>} : vector<8x8xbf16>, vector<8x8xbf16>, vector<8x8xf32> -> vector<8x8xf32>
    %39 = arith.truncf %38 : vector<8x8xf32> to vector<8x8xbf16>
    %c0_27 = arith.constant 0 : index
    %c0_28 = arith.constant 0 : index
    %c0_29 = arith.constant 0 : index
    %40 = vector.load %arg6[%c0_27, %c0_28, %c0_29] : memref<1x8x32xbf16, #tpu.memory_space<vmem>>, vector<1x8x32xbf16>
    %41 = vector.shape_cast %40 : vector<1x8x32xbf16> to vector<8x32xbf16>
    %cst_30 = arith.constant dense<0.000000e+00> : vector<8x32xf32>
    %42 = tpu.matmul %39, %41, %cst_30 {dimension_numbers = #tpu.dot_dimension_numbers<[1], [0], [0], [1], [0, 0, 1, 1], [], []>} : vector<8x8xbf16>, vector<8x32xbf16>, vector<8x32xf32> -> vector<8x32xf32>
    %c0_i32_31 = arith.constant 0 : i32
    %43 = arith.cmpi eq, %arg1, %c0_i32_31 : i32
    %44 = arith.extui %43 : i1 to i32
    %c0_i32_32 = arith.constant 0 : i32
    %45 = arith.cmpi ne, %44, %c0_i32_32 : i32
    scf.if %45 {
      %c0_35 = arith.constant 0 : index
      %c0_36 = arith.constant 0 : index
      %49 = vector.load %arg7[%c0_35, %c0_36] : memref<1x32xf32, #tpu.memory_space<vmem>>, vector<1x32xf32>
      %50 = vector.broadcast %49 : vector<1x32xf32> to vector<8x32xf32>
      %51 = arith.addf %50, %42 : vector<8x32xf32>
      %c0_37 = arith.constant 0 : index
      %c0_38 = arith.constant 0 : index
      %c0_39 = arith.constant 0 : index
      %52 = vector.load %arg10[%c0_37, %c0_38, %c0_39] : memref<1x8x32xf32, #tpu.memory_space<vmem>>, vector<1x8x32xf32>
      %53 = vector.shape_cast %52 : vector<1x8x32xf32> to vector<8x32xf32>
      %54 = vector.shape_cast %51 : vector<8x32xf32> to vector<1x8x32xf32>
      tpu.vector_store %arg10[%c0_37, %c0_38, %c0_39], %54 {strides = array<i32>} : memref<1x8x32xf32, #tpu.memory_space<vmem>>, vector<1x8x32xf32>,
    } else {
    }
    %c0_i32_33 = arith.constant 0 : i32
    %46 = arith.cmpi ne, %arg1, %c0_i32_33 : i32
    %47 = arith.extui %46 : i1 to i32
    %c0_i32_34 = arith.constant 0 : i32
    %48 = arith.cmpi ne, %47, %c0_i32_34 : i32
    scf.if %48 {
      %c0_35 = arith.constant 0 : index
      %c0_36 = arith.constant 0 : index
      %c0_37 = arith.constant 0 : index
      %49 = vector.load %arg10[%c0_35, %c0_36, %c0_37] : memref<1x8x32xf32, #tpu.memory_space<vmem>>, vector<1x8x32xf32>
      %50 = vector.shape_cast %49 : vector<1x8x32xf32> to vector<8x32xf32>
      %51 = arith.addf %50, %42 : vector<8x32xf32>
      %c0_38 = arith.constant 0 : index
      %c0_39 = arith.constant 0 : index
      %c0_40 = arith.constant 0 : index
      %52 = vector.load %arg10[%c0_38, %c0_39, %c0_40] : memref<1x8x32xf32, #tpu.memory_space<vmem>>, vector<1x8x32xf32>
      %53 = vector.shape_cast %52 : vector<1x8x32xf32> to vector<8x32xf32>
      %54 = vector.shape_cast %51 : vector<8x32xf32> to vector<1x8x32xf32>
      tpu.vector_store %arg10[%c0_38, %c0_39, %c0_40], %54 {strides = array<i32>} : memref<1x8x32xf32, #tpu.memory_space<vmem>>, vector<1x8x32xf32>,
    } else {
    }
    return
  }
  func.func @transform_0(%arg0: i32, %arg1: i32) -> (i32, i32, i32) {
    %c0_i32 = arith.constant 0 : i32
    %c0_i32_0 = arith.constant 0 : i32
    %c0_i32_1 = arith.constant 0 : i32
    return %arg0, %c0_i32, %c0_i32_0 : i32, i32, i32
  }
  func.func @transform_1(%arg0: i32, %arg1: i32) -> (i32, i32, i32) {
    %c0_i32 = arith.constant 0 : i32
    %c0_i32_0 = arith.constant 0 : i32
    %c0_i32_1 = arith.constant 0 : i32
    return %arg1, %c0_i32, %c0_i32_0 : i32, i32, i32
  }
  func.func @transform_2(%arg0: i32, %arg1: i32) -> (i32, i32, i32) {
    %c0_i32 = arith.constant 0 : i32
    %c0_i32_0 = arith.constant 0 : i32
    %c0_i32_1 = arith.constant 0 : i32
    return %arg1, %c0_i32, %c0_i32_0 : i32, i32, i32
  }
  func.func @transform_3(%arg0: i32, %arg1: i32) -> (i32, i32, i32) {
    %c0_i32 = arith.constant 0 : i32
    %c0_i32_0 = arith.constant 0 : i32
    %c0_i32_1 = arith.constant 0 : i32
    return %arg1, %c0_i32, %c0_i32_0 : i32, i32, i32
  }
  func.func @transform_4(%arg0: i32, %arg1: i32) -> (i32, i32, i32) {
    %c0_i32 = arith.constant 0 : i32
    %c0_i32_0 = arith.constant 0 : i32
    %c0_i32_1 = arith.constant 0 : i32
    return %arg1, %c0_i32, %c0_i32_0 : i32, i32, i32
  }
  func.func @transform_5(%arg0: i32, %arg1: i32) -> (i32, i32) {
    %c0_i32 = arith.constant 0 : i32
    %c0_i32_0 = arith.constant 0 : i32
    %c0_i32_1 = arith.constant 0 : i32
    return %c0_i32, %c0_i32_0 : i32, i32
  }
  func.func @transform_6(%arg0: i32, %arg1: i32) -> (i32, i32, i32) {
    %c0_i32 = arith.constant 0 : i32
    %c0_i32_0 = arith.constant 0 : i32
    %c0_i32_1 = arith.constant 0 : i32
    return %arg0, %c0_i32, %c0_i32_0 : i32, i32, i32
  }
  func.func @transform_7(%arg0: i32, %arg1: i32) -> (i32, i32, i32) {
    %c0_i32 = arith.constant 0 : i32
    %c0_i32_0 = arith.constant 0 : i32
    %c0_i32_1 = arith.constant 0 : i32
    return %arg0, %c0_i32, %c0_i32_0 : i32, i32, i32
  }
  func.func @transform_8(%arg0: i32, %arg1: i32) -> (i32, i32, i32) {
    %c0_i32 = arith.constant 0 : i32
    %c0_i32_0 = arith.constant 0 : i32
    %c0_i32_1 = arith.constant 0 : i32
    return %arg0, %c0_i32, %c0_i32_0 : i32, i32, i32
  }
  func.func @transform_9(%arg0: i32, %arg1: i32) -> (i32, i32, i32, i32) {
    %c0_i32 = arith.constant 0 : i32
    %c0_i32_0 = arith.constant 0 : i32
    %c0_i32_1 = arith.constant 0 : i32
    return %arg0, %arg1, %c0_i32, %c0_i32_0 : i32, i32, i32, i32
  }
}

</mosaic_0001>

<llo_original>
// kernel: tpu_custom_call.1
$region0: #{tpu_custom_call.1}
  #allocation0 [shape = 'u32[]', space=smem, size = 0x4, offset = 0x4, fixed_abs, tag = 'smem constant byte address 0x4 - core index']
  #allocation1 [shape = 'u32[144,128]{1,0:T(1,128)}', space=vmem, size = 0x12000, scoped, tag = 'internal scratch']
  #allocation2 [shape = 'f32[8,8]{1,0:T(8,128)}', space=vmem, size = 0x1000, scoped, tag = 'scratch operand']
  %s0 = inlined_call_operand.vmem [shape: bf16[2,8,32], index: 0, kind: input, shape index: {}]
  %s1 = inlined_call_operand.vmem [shape: bf16[4,32,8], index: 1, kind: input, shape index: {}]
  %s2 = inlined_call_operand.vmem [shape: bf16[4,32,8], index: 2, kind: input, shape index: {}]
  %s3 = inlined_call_operand.vmem [shape: bf16[4,32,8], index: 3, kind: input, shape index: {}]
  %s4 = inlined_call_operand.vmem [shape: bf16[4,8,32], index: 4, kind: input, shape index: {}]
  %s5 = inlined_call_operand.vmem [shape: f32[1,32], index: 5, kind: input, shape index: {}]
  %s6 = inlined_call_operand.vmem [shape: f32[2,1,8], index: 6, kind: input, shape index: {}]
  %s7 = inlined_call_operand.vmem [shape: f32[2,8,1], index: 7, kind: input, shape index: {}]
  %s8 = inlined_call_operand.hbm [shape: f32[2,8,32], index: 8, kind: output, shape index: {0}]
  %s9 = inlined_call_operand.hbm [shape: f32[2,4,8,8], index: 9, kind: output, shape index: {1}]
  %10 = xla_tuple %s8, %s9
  %s11 = sld [smem:[#allocation0]]
  $region85: #{tpu_custom_call.1} parent=0
    _
  %s13 = ssub.s32 1, %s11
  %s14 = scalar_select 0, %s13, %s11
  $region1: #{tpu_custom_call.1} parent=0
    #allocation3 [shape = 'u8[8192]{0}', space=vmem, size = 0x2000, scoped, tag = 'output window, operand 0']
    #allocation4 [shape = 's32[2]{0}', space=sflag, size = 0x8, scoped, tag = 'scoped memory for tpu_custom_call.1']
    #allocation5 [shape = 'u8[8192]{0}', space=vmem, size = 0x2000, scoped, tag = 'output window, operand 1']
    #allocation6 [shape = 's32[2]{0}', space=sflag, size = 0x8, scoped, tag = 'scoped memory for tpu_custom_call.1']
    %15 = vsyncpa [#allocation4], 0
    %s16 = scalar_lea.sflag [#allocation4], 1
    %17 = vsyncpa %s16, 0
    %18 = vsyncpa [#allocation6], 0
    %s19 = scalar_lea.sflag [#allocation6], 1
    %20 = vsyncpa %s19, 0
    loop: start=0, step=1, limit=10
    $region2: #{tpu_custom_call.1} parent=1 // loop_pre_header
      _
    $region3: #{tpu_custom_call.1} parent=1 // loop_header
      %s22 = sphi 0, %s26
      %p23 = scmp.ge.s32.totalorder %s22, 10
      %s29 = sphi 0, %s41
      %s30 = sphi 0, %s37
      %s31 = sphi 0, %s29
      %s32 = sphi 0, %s30
      %s33 = sphi 0, %s31
      %s34 = sphi 0, %s32
      %s44 = sphi 0, %s46
      %s47 = sphi 0, %s44
      %s48 = sphi 0, %s47
      %s64 = sphi 0, %s48
      %s70 = sphi 0, %s72
      %s73 = sphi 0, %s70
      %s74 = sphi 0, %s73
      %s90 = sphi 0, %s74
      %s96 = sphi 0, %s98
      %s99 = sphi 0, %s96
      %s100 = sphi 0, %s99
      %s116 = sphi 0, %s100
      %s122 = sphi 0, %s124
      %s125 = sphi 0, %s122
      %s126 = sphi 0, %s125
      %s142 = sphi 0, %s126
      %s148 = sphi 0, %s150
      %s151 = sphi 0, %s148
      %s152 = sphi 0, %s151
      %s168 = sphi 0, %s152
      %s172 = sphi 0, %s172
      %s174 = sphi 0, %s172
      %s175 = sphi 0, %s174
      %s189 = sphi 0, %s175
      %s195 = sphi 0, %s197
      %s198 = sphi 0, %s195
      %s199 = sphi 0, %s198
      %s215 = sphi 0, %s199
      %s221 = sphi 0, %s223
      %s224 = sphi 0, %s221
      %s225 = sphi 0, %s224
      %s241 = sphi 0, %s225
      %s247 = sphi 0, %s249
      %s250 = sphi 0, %s247
      %s251 = sphi 0, %s250
      %s267 = sphi 0, %s251
      %s275 = sphi 0, %s277
      %s278 = sphi 0, %s275
      %s279 = sphi 0, %s278
      %s295 = sphi 0, %s279
    $region4: #{tpu_custom_call.1} parent=1 // loop_header_branch
      %25 = sbr.rel (%p23) target = $region8
    $region5: #{tpu_custom_call.1} parent=1 // loop_body
      %s27 = ssub.s32 %s22, 1
      %s28 = ssub.s32 %s22, 2
      %s35 = sadd.s32 1, %s30
      %p36 = scmp.ge.s32.totalorder %s35, 4
      %s37 = scalar_select %p36, 0, %s35
      %s38 = sadd.s32 1, %s29
      %s39 = scalar_select %p36, %s38, %s29
      %p40 = scmp.ge.s32.totalorder %s39, 2
      %s41 = scalar_select %p40, 0, %s39
      %s42 = ssub.s32 %s29, %s41
      %p43 = scmp.eq.s32.totalorder %s42, 0
      %s45 = sadd.s32 %s44, 1
      %s46 = scalar_select %p43, %s44, %s45
      %p49 = pneg %p43
      %p50 = scmp.eq.s32.totalorder %s22, 7
      %p51 = por %p49, %p50
      %p52 = scmp.ne.s32.totalorder %s44, %s47
      %p53 = scmp.eq.s32.totalorder %s22, 0
      %p54 = por %p52, %p53
      %p55 = scmp.ne.s32.totalorder %s44, %s47
      %p56 = scmp.eq.s32.totalorder %s27, 7
      %p57 = por %p55, %p56
      %p58 = scmp.ne.s32.totalorder %s47, %s48
      %p59 = scmp.eq.s32.totalorder %s27, 0
      %p60 = por %p58, %p59
      %p61 = scmp.ne.s32.totalorder %s47, %s48
      %p62 = scmp.eq.s32.totalorder %s28, 7
      %p63 = por %p61, %p62
      %p65 = scmp.ne.s32.totalorder %s48, %s64
      %p66 = scmp.eq.s32.totalorder %s28, 0
      %p67 = por %p65, %p66
      %s68 = ssub.s32 %s30, %s37
      %p69 = scmp.eq.s32.totalorder %s68, 0
      %s71 = sadd.s32 %s70, 1
      %s72 = scalar_select %p69, %s70, %s71
      %p75 = pneg %p69
      %p76 = scmp.eq.s32.totalorder %s22, 7
      %p77 = por %p75, %p76
      %p78 = scmp.ne.s32.totalorder %s70, %s73
      %p79 = scmp.eq.s32.totalorder %s22, 0
      %p80 = por %p78, %p79
      %p81 = scmp.ne.s32.totalorder %s70, %s73
      %p82 = scmp.eq.s32.totalorder %s27, 7
      %p83 = por %p81, %p82
      %p84 = scmp.ne.s32.totalorder %s73, %s74
      %p85 = scmp.eq.s32.totalorder %s27, 0
      %p86 = por %p84, %p85
      %p87 = scmp.ne.s32.totalorder %s73, %s74
      %p88 = scmp.eq.s32.totalorder %s28, 7
      %p89 = por %p87, %p88
      %p91 = scmp.ne.s32.totalorder %s74, %s90
      %p92 = scmp.eq.s32.totalorder %s28, 0
      %p93 = por %p91, %p92
      %s94 = ssub.s32 %s30, %s37
      %p95 = scmp.eq.s32.totalorder %s94, 0
      %s97 = sadd.s32 %s96, 1
      %s98 = scalar_select %p95, %s96, %s97
      %p101 = pneg %p95
      %p102 = scmp.eq.s32.totalorder %s22, 7
      %p103 = por %p101, %p102
      %p104 = scmp.ne.s32.totalorder %s96, %s99
      %p105 = scmp.eq.s32.totalorder %s22, 0
      %p106 = por %p104, %p105
      %p107 = scmp.ne.s32.totalorder %s96, %s99
      %p108 = scmp.eq.s32.totalorder %s27, 7
      %p109 = por %p107, %p108
      %p110 = scmp.ne.s32.totalorder %s99, %s100
      %p111 = scmp.eq.s32.totalorder %s27, 0
      %p112 = por %p110, %p111
      %p113 = scmp.ne.s32.totalorder %s99, %s100
      %p114 = scmp.eq.s32.totalorder %s28, 7
      %p115 = por %p113, %p114
      %p117 = scmp.ne.s32.totalorder %s100, %s116
      %p118 = scmp.eq.s32.totalorder %s28, 0
      %p119 = por %p117, %p118
      %s120 = ssub.s32 %s30, %s37
      %p121 = scmp.eq.s32.totalorder %s120, 0
      %s123 = sadd.s32 %s122, 1
      %s124 = scalar_select %p121, %s122, %s123
      %p127 = pneg %p121
      %p128 = scmp.eq.s32.totalorder %s22, 7
      %p129 = por %p127, %p128
      %p130 = scmp.ne.s32.totalorder %s122, %s125
      %p131 = scmp.eq.s32.totalorder %s22, 0
      %p132 = por %p130, %p131
      %p133 = scmp.ne.s32.totalorder %s122, %s125
      %p134 = scmp.eq.s32.totalorder %s27, 7
      %p135 = por %p133, %p134
      %p136 = scmp.ne.s32.totalorder %s125, %s126
      %p137 = scmp.eq.s32.totalorder %s27, 0
      %p138 = por %p136, %p137
      %p139 = scmp.ne.s32.totalorder %s125, %s126
      %p140 = scmp.eq.s32.totalorder %s28, 7
      %p141 = por %p139, %p140
      %p143 = scmp.ne.s32.totalorder %s126, %s142
      %p144 = scmp.eq.s32.totalorder %s28, 0
      %p145 = por %p143, %p144
      %s146 = ssub.s32 %s30, %s37
      %p147 = scmp.eq.s32.totalorder %s146, 0
      %s149 = sadd.s32 %s148, 1
      %s150 = scalar_select %p147, %s148, %s149
      %p153 = pneg %p147
      %p154 = scmp.eq.s32.totalorder %s22, 7
      %p155 = por %p153, %p154
      %p156 = scmp.ne.s32.totalorder %s148, %s151
      %p157 = scmp.eq.s32.totalorder %s22, 0
      %p158 = por %p156, %p157
      %p159 = scmp.ne.s32.totalorder %s148, %s151
      %p160 = scmp.eq.s32.totalorder %s27, 7
      %p161 = por %p159, %p160
      %p162 = scmp.ne.s32.totalorder %s151, %s152
      %p163 = scmp.eq.s32.totalorder %s27, 0
      %p164 = por %p162, %p163
      %p165 = scmp.ne.s32.totalorder %s151, %s152
      %p166 = scmp.eq.s32.totalorder %s28, 7
      %p167 = por %p165, %p166
      %p169 = scmp.ne.s32.totalorder %s152, %s168
      %p170 = scmp.eq.s32.totalorder %s28, 0
      %p171 = por %p169, %p170
      %s173 = sadd.s32 %s172, 1
      %p176 = scmp.eq.s32.totalorder %s22, 7
      %p177 = scmp.ne.s32.totalorder %s172, %s174
      %p178 = scmp.eq.s32.totalorder %s22, 0
      %p179 = por %p177, %p178
      %p180 = scmp.ne.s32.totalorder %s172, %s174
      %p181 = scmp.eq.s32.totalorder %s27, 7
      %p182 = por %p180, %p181
      %p183 = scmp.ne.s32.totalorder %s174, %s175
      %p184 = scmp.eq.s32.totalorder %s27, 0
      %p185 = por %p183, %p184
      %p186 = scmp.ne.s32.totalorder %s174, %s175
      %p187 = scmp.eq.s32.totalorder %s28, 7
      %p188 = por %p186, %p187
      %p190 = scmp.ne.s32.totalorder %s175, %s189
      %p191 = scmp.eq.s32.totalorder %s28, 0
      %p192 = por %p190, %p191
      %s193 = ssub.s32 %s29, %s41
      %p194 = scmp.eq.s32.totalorder %s193, 0
      %s196 = sadd.s32 %s195, 1
      %s197 = scalar_select %p194, %s195, %s196
      %p200 = pneg %p194
      %p201 = scmp.eq.s32.totalorder %s22, 7
      %p202 = por %p200, %p201
      %p203 = scmp.ne.s32.totalorder %s195, %s198
      %p204 = scmp.eq.s32.totalorder %s22, 0
      %p205 = por %p203, %p204
      %p206 = scmp.ne.s32.totalorder %s195, %s198
      %p207 = scmp.eq.s32.totalorder %s27, 7
      %p208 = por %p206, %p207
      %p209 = scmp.ne.s32.totalorder %s198, %s199
      %p210 = scmp.eq.s32.totalorder %s27, 0
      %p211 = por %p209, %p210
      %p212 = scmp.ne.s32.totalorder %s198, %s199
      %p213 = scmp.eq.s32.totalorder %s28, 7
      %p214 = por %p212, %p213
      %p216 = scmp.ne.s32.totalorder %s199, %s215
      %p217 = scmp.eq.s32.totalorder %s28, 0
      %p218 = por %p216, %p217
      %s219 = ssub.s32 %s29, %s41
      %p220 = scmp.eq.s32.totalorder %s219, 0
      %s222 = sadd.s32 %s221, 1
      %s223 = scalar_select %p220, %s221, %s222
      %p226 = pneg %p220
      %p227 = scmp.eq.s32.totalorder %s22, 7
      %p228 = por %p226, %p227
      %p229 = scmp.ne.s32.totalorder %s221, %s224
      %p230 = scmp.eq.s32.totalorder %s22, 0
      %p231 = por %p229, %p230
      %p232 = scmp.ne.s32.totalorder %s221, %s224
      %p233 = scmp.eq.s32.totalorder %s27, 7
      %p234 = por %p232, %p233
      %p235 = scmp.ne.s32.totalorder %s224, %s225
      %p236 = scmp.eq.s32.totalorder %s27, 0
      %p237 = por %p235, %p236
      %p238 = scmp.ne.s32.totalorder %s224, %s225
      %p239 = scmp.eq.s32.totalorder %s28, 7
      %p240 = por %p238, %p239
      %p242 = scmp.ne.s32.totalorder %s225, %s241
      %p243 = scmp.eq.s32.totalorder %s28, 0
      %p244 = por %p242, %p243
      %s245 = ssub.s32 %s29, %s41
      %p246 = scmp.eq.s32.totalorder %s245, 0
      %s248 = sadd.s32 %s247, 1
      %s249 = scalar_select %p246, %s247, %s248
      %p252 = pneg %p246
      %p253 = scmp.eq.s32.totalorder %s22, 7
      %p254 = por %p252, %p253
      %p255 = scmp.ne.s32.totalorder %s247, %s250
      %p256 = scmp.eq.s32.totalorder %s22, 0
      %p257 = por %p255, %p256
      %p258 = scmp.ne.s32.totalorder %s247, %s250
      %p259 = scmp.eq.s32.totalorder %s27, 7
      %p260 = por %p258, %p259
      %p261 = scmp.ne.s32.totalorder %s250, %s251
      %p262 = scmp.eq.s32.totalorder %s27, 0
      %p263 = por %p261, %p262
      %p264 = scmp.ne.s32.totalorder %s250, %s251
      %p265 = scmp.eq.s32.totalorder %s28, 7
      %p266 = por %p264, %p265
      %p268 = scmp.ne.s32.totalorder %s251, %s267
      %p269 = scmp.eq.s32.totalorder %s28, 0
      %p270 = por %p268, %p269
      %s271 = ssub.s32 %s29, %s41
      %s272 = ssub.s32 %s30, %s37
      %s273 = sor.u32 %s271, %s272
      %p274 = scmp.eq.s32.totalorder %s273, 0
      %s276 = sadd.s32 %s275, 1
      %s277 = scalar_select %p274, %s275, %s276
      %p280 = pneg %p274
      %p281 = scmp.eq.s32.totalorder %s22, 7
      %p282 = por %p280, %p281
      %p283 = scmp.ne.s32.totalorder %s275, %s278
      %p284 = scmp.eq.s32.totalorder %s22, 0
      %p285 = por %p283, %p284
      %p286 = scmp.ne.s32.totalorder %s275, %s278
      %p287 = scmp.eq.s32.totalorder %s27, 7
      %p288 = por %p286, %p287
      %p289 = scmp.ne.s32.totalorder %s278, %s279
      %p290 = scmp.eq.s32.totalorder %s27, 0
      %p291 = por %p289, %p290
      %p292 = scmp.ne.s32.totalorder %s278, %s279
      %p293 = scmp.eq.s32.totalorder %s28, 7
      %p294 = por %p292, %p293
      %p296 = scmp.ne.s32.totalorder %s279, %s295
      %p297 = scmp.eq.s32.totalorder %s28, 0
      %p298 = por %p296, %p297
      %p299 = scmp.le.s32.totalorder 1, %s22
      %p300 = scmp.lt.s32.totalorder %s22, 9
      %p301 = pnand %p299, %p300
      %p302 = pneg %p301
      // Predicated region
      $region9: #{tpu_custom_call.1} parent=5 // pred_check
        _
      $region10: #{tpu_custom_call.1} parent=5 // pred_check_branch
        %304 = sbr.rel (%p301) target = $region12
      $region11: #{tpu_custom_call.1} parent=5 // pred_region
        %s305 = ssub.s32 %s22, 1
        // Predicated region
        $region13: #{tpu_custom_call.1} parent=11 // pred_check
          %p306 = pneg %p185
        $region14: #{tpu_custom_call.1} parent=11 // pred_check_branch
          %308 = sbr.rel (%p306) target = $region16
        $region15: #{tpu_custom_call.1} parent=11 // pred_region
          _
        $region16: #{tpu_custom_call.1} parent=11 // pred_fallthru
          _
      $region12: #{tpu_custom_call.1} parent=5 // pred_fallthru
        _
      %p309 = scmp.lt.s32.totalorder %s22, 8
      // Predicated region
      $region17: #{tpu_custom_call.1} parent=5 // pred_check
        %p310 = pneg %p309
      $region18: #{tpu_custom_call.1} parent=5 // pred_check_branch
        %312 = sbr.rel (%p310) target = $region20
      $region19: #{tpu_custom_call.1} parent=5 // pred_region
        // Predicated region
        $region21: #{tpu_custom_call.1} parent=19 // pred_check
          %p313 = pneg %p54
        $region22: #{tpu_custom_call.1} parent=19 // pred_check_branch
          %315 = sbr.rel (%p313) target = $region24
        $region23: #{tpu_custom_call.1} parent=19 // pred_region
          %p316 = scmp.lt.s32.totalorder %s29, 1
          %s317 = scalar_select %p316, %s29, 1
          %s318 = smul.addr %s317, 4
          %s319 = scalar_lea.vmem %s0, %s318
        $region24: #{tpu_custom_call.1} parent=19 // pred_fallthru
          _
        // Predicated region
        $region25: #{tpu_custom_call.1} parent=19 // pred_check
          %p320 = pneg %p80
        $region26: #{tpu_custom_call.1} parent=19 // pred_check_branch
          %322 = sbr.rel (%p320) target = $region28
        $region27: #{tpu_custom_call.1} parent=19 // pred_region
          %p323 = scmp.lt.s32.totalorder %s30, 3
          %s324 = scalar_select %p323, %s30, 3
          %s325 = smul.addr %s324, 4
          %s326 = smul.addr %s325, 4
          %s327 = scalar_lea.vmem %s1, %s326
        $region28: #{tpu_custom_call.1} parent=19 // pred_fallthru
          _
        // Predicated region
        $region29: #{tpu_custom_call.1} parent=19 // pred_check
          %p328 = pneg %p106
        $region30: #{tpu_custom_call.1} parent=19 // pred_check_branch
          %330 = sbr.rel (%p328) target = $region32
        $region31: #{tpu_custom_call.1} parent=19 // pred_region
          %p331 = scmp.lt.s32.totalorder %s30, 3
          %s332 = scalar_select %p331, %s30, 3
          %s333 = smul.addr %s332, 4
          %s334 = smul.addr %s333, 4
          %s335 = scalar_lea.vmem %s2, %s334
        $region32: #{tpu_custom_call.1} parent=19 // pred_fallthru
          _
        // Predicated region
        $region33: #{tpu_custom_call.1} parent=19 // pred_check
          %p336 = pneg %p132
        $region34: #{tpu_custom_call.1} parent=19 // pred_check_branch
          %338 = sbr.rel (%p336) target = $region36
        $region35: #{tpu_custom_call.1} parent=19 // pred_region
          %p339 = scmp.lt.s32.totalorder %s30, 3
          %s340 = scalar_select %p339, %s30, 3
          %s341 = smul.addr %s340, 4
          %s342 = smul.addr %s341, 4
          %s343 = scalar_lea.vmem %s3, %s342
        $region36: #{tpu_custom_call.1} parent=19 // pred_fallthru
          _
        // Predicated region
        $region37: #{tpu_custom_call.1} parent=19 // pred_check
          %p344 = pneg %p158
        $region38: #{tpu_custom_call.1} parent=19 // pred_check_branch
          %346 = sbr.rel (%p344) target = $region40
        $region39: #{tpu_custom_call.1} parent=19 // pred_region
          %p347 = scmp.lt.s32.totalorder %s30, 3
          %s348 = scalar_select %p347, %s30, 3
          %s349 = smul.addr %s348, 4
          %s350 = scalar_lea.vmem %s4, %s349
        $region40: #{tpu_custom_call.1} parent=19 // pred_fallthru
          _
        // Predicated region
        $region41: #{tpu_custom_call.1} parent=19 // pred_check
          %p351 = pneg %p205
        $region42: #{tpu_custom_call.1} parent=19 // pred_check_branch
          %353 = sbr.rel (%p351) target = $region44
        $region43: #{tpu_custom_call.1} parent=19 // pred_region
          %p354 = scmp.lt.s32.totalorder %s29, 1
          %s355 = scalar_select %p354, %s29, 1
          %s356 = scalar_lea.vmem %s6, %s355
        $region44: #{tpu_custom_call.1} parent=19 // pred_fallthru
          _
        // Predicated region
        $region45: #{tpu_custom_call.1} parent=19 // pred_check
          %p357 = pneg %p231
        $region46: #{tpu_custom_call.1} parent=19 // pred_check_branch
          %359 = sbr.rel (%p357) target = $region48
        $region47: #{tpu_custom_call.1} parent=19 // pred_region
          %p360 = scmp.lt.s32.totalorder %s29, 1
          %s361 = scalar_select %p360, %s29, 1
          %s362 = smul.addr %s361, 8
          %s363 = scalar_lea.vmem %s7, %s362
        $region48: #{tpu_custom_call.1} parent=19 // pred_fallthru
          _
      $region20: #{tpu_custom_call.1} parent=5 // pred_fallthru
        _
      %p364 = scmp.le.s32.totalorder 1, %s22
      %p365 = scmp.lt.s32.totalorder %s22, 9
      %p366 = pnand %p364, %p365
      %p367 = pneg %p366
      // Predicated region
      $region49: #{tpu_custom_call.1} parent=5 // pred_check
        _
      $region50: #{tpu_custom_call.1} parent=5 // pred_check_branch
        %369 = sbr.rel (%p366) target = $region52
      $region51: #{tpu_custom_call.1} parent=5 // pred_region
        %s370 = ssub.s32 %s22, 1
        %p371 = scmp.lt.s32.totalorder %s31, 1
        %s372 = scalar_select %p371, %s31, 1
        %s373 = smul.addr %s372, 4
        %s374 = scalar_lea.vmem %s0, %s373
        %p375 = pneg %p60
        %p376 = pneg %p57
        %p377 = scmp.lt.s32.totalorder %s32, 3
        %s378 = scalar_select %p377, %s32, 3
        %s379 = smul.addr %s378, 4
        %s380 = smul.addr %s379, 4
        %s381 = scalar_lea.vmem %s1, %s380
        %p382 = pneg %p86
        %p383 = pneg %p83
        %p384 = scmp.lt.s32.totalorder %s32, 3
        %s385 = scalar_select %p384, %s32, 3
        %s386 = smul.addr %s385, 4
        %s387 = smul.addr %s386, 4
        %s388 = scalar_lea.vmem %s2, %s387
        %p389 = pneg %p112
        %p390 = pneg %p109
        %p391 = scmp.lt.s32.totalorder %s32, 3
        %s392 = scalar_select %p391, %s32, 3
        %s393 = smul.addr %s392, 4
        %s394 = smul.addr %s393, 4
        %s395 = scalar_lea.vmem %s3, %s394
        %p396 = pneg %p138
        %p397 = pneg %p135
        %p398 = scmp.lt.s32.totalorder %s32, 3
        %s399 = scalar_select %p398, %s32, 3
        %s400 = smul.addr %s399, 4
        %s401 = scalar_lea.vmem %s4, %s400
        %p402 = pneg %p164
        %p403 = pneg %p161
        %p404 = pneg %p185
        %p405 = pneg %p182
        %p406 = scmp.lt.s32.totalorder %s31, 1
        %s407 = scalar_select %p406, %s31, 1
        %s408 = scalar_lea.vmem %s6, %s407
        %p409 = pneg %p211
        %p410 = pneg %p208
        %p411 = scmp.lt.s32.totalorder %s31, 1
        %s412 = scalar_select %p411, %s31, 1
        %s413 = smul.addr %s412, 8
        %s414 = scalar_lea.vmem %s7, %s413
        %p415 = pneg %p237
        %p416 = pneg %p234
        %p417 = pneg %p263
        %p418 = pneg %p260
        %s419 = sand.u32 %s250, 1
        %s420 = scalar_lea.sflag [#allocation4], %s419
        %s421 = sand.u32 %s250, 1
        %s422 = smul.addr %s421, 8
        %s423 = scalar_lea.vmem [#allocation3], %s422
        %p424 = pneg %p291
        %p425 = pneg %p288
        %s426 = sand.u32 %s278, 1
        %s427 = scalar_lea.sflag [#allocation6], %s426
        %s428 = sand.u32 %s278, 1
        %s429 = smul.addr %s428, 8
        %s430 = scalar_lea.vmem [#allocation5], %s429
        %p431 = scmp.lt.s32.totalorder %s31, 1
        %s432 = scalar_select %p431, %s31, 1
        %s433 = smul.addr %s432, 4
        %s434 = scalar_lea.vmem %s0, %s433
        %p435 = scmp.lt.s32.totalorder %s32, 3
        %s436 = scalar_select %p435, %s32, 3
        %s437 = smul.addr %s436, 4
        %s438 = smul.addr %s437, 4
        %s439 = scalar_lea.vmem %s1, %s438
        %p440 = scmp.lt.s32.totalorder %s32, 3
        %s441 = scalar_select %p440, %s32, 3
        %s442 = smul.addr %s441, 4
        %s443 = smul.addr %s442, 4
        %s444 = scalar_lea.vmem %s2, %s443
        %p445 = scmp.lt.s32.totalorder %s32, 3
        %s446 = scalar_select %p445, %s32, 3
        %s447 = smul.addr %s446, 4
        %s448 = smul.addr %s447, 4
        %s449 = scalar_lea.vmem %s3, %s448
        %p450 = scmp.lt.s32.totalorder %s32, 3
        %s451 = scalar_select %p450, %s32, 3
        %s452 = smul.addr %s451, 4
        %s453 = scalar_lea.vmem %s4, %s452
        %p454 = scmp.lt.s32.totalorder %s31, 1
        %s455 = scalar_select %p454, %s31, 1
        %s456 = scalar_lea.vmem %s6, %s455
        %p457 = scmp.lt.s32.totalorder %s31, 1
        %s458 = scalar_select %p457, %s31, 1
        %s459 = smul.addr %s458, 8
        %s460 = scalar_lea.vmem %s7, %s459
        %p462 = scmp.eq.s32.totalorder %s32, 0
        // Predicated region
        $region53: #{tpu_custom_call.1} parent=51 // pred_check
          %p463 = pneg %p462
        $region54: #{tpu_custom_call.1} parent=51 // pred_check_branch
          %465 = sbr.rel (%p463) target = $region56
        $region55: #{tpu_custom_call.1} parent=51 // pred_region
          %v466 = vld [vmem:[%s460] sm:$0xff]
          %v467 = vld [vmem:[%s456] sm:$0x1]
          %469 = vset.pattern.permute.xlu0 0
          %470 = vperm.xlu0 %469, %v466
          %v471 = vpop.permute.xlu0 %470
          %v474 = vlaneseq
          %v475 = vshrl.u32 %v474, 7
          %v476 = vsub.s32 0, %v475
          %v477 = vrot.slane %v467, %v476
          %v479 = vmul.f32 %v471, %v477
          %vm480 = vcmp.eq.f32.partialorder %v479, 0.0
          %v481 = vsel %vm480, -1e+30, 0.0
          %vm482 = vcmask 64512
          %483 = vst.msk [vmem:[#allocation2] sm:$0xff] %vm482, %v481
        $region56: #{tpu_custom_call.1} parent=51 // pred_fallthru
          _
        %v484 = vld [vmem:[%s434] sm:$0xf]
        %v485 = vld [vmem:[%s439] sm:$0xf]
        %v486 = vld [vmem:[%s439 + $0x4] sm:$0xf]
        %v487 = vld [vmem:[%s439 + $0x8] sm:$0xf]
        %v488 = vld [vmem:[%s439 + $0xc] sm:$0xf]
        %v493 = vunpack.c.l.b16 %v485
        %v494 = vunpack.c.l.b16 %v486
        %v495 = vunpack.c.l.b16 %v487
        %v496 = vunpack.c.l.b16 %v488
        %v497 = vpack.c.b16 %v494, %v493
        %v498 = vpack.c.b16 %v496, %v495
        %vm501 = vcmask 261120
        %v503 = vsel %vm501, %v484, 0
        %505 = vmatprep.subr.bf16.mxu0 0
        %506 = vmatpush1.bf16.msra.mxu0 0
        %507 = vmatprep.subr.bf16.mxu0 0
        %508 = vmatpush1.bf16.msra.mxu0 0
        %509 = vmatprep.subr.bf16.mxu0 0
        %510 = vmatpush1.bf16.msra.mxu0 0
        %511 = vmatprep.subr.bf16.mxu0 0
        %512 = vmatpush1.bf16.msra.mxu0 0
        %513 = vmatprep.subr.bf16.mxu0 0
        %514 = vmatpush1.bf16.msra.mxu0 0
        %515 = vmatprep.subr.bf16.mxu0 0
        %516 = vmatpush1.bf16.msra.mxu0 0
        %517 = vmatprep.subr.bf16.mxu0 0
        %518 = vmatpush1.bf16.msra.mxu0 %v498
        %519 = vmatprep.subr.bf16.mxu0 0
        %520 = vmatpush1.bf16.msra.mxu0 %v497
        %521 = vmatprep.subr.bf16.mxu0 0
        %522 = vmatpush2.bf16.msra.mxu0 0
        %523 = vmatprep.subr.bf16.mxu0 0
        %524 = vmatpush2.bf16.msra.mxu0 0
        %525 = vmatprep.subr.bf16.mxu0 0
        %526 = vmatpush2.bf16.msra.mxu0 0
        %527 = vmatprep.subr.bf16.mxu0 0
        %528 = vmatpush2.bf16.msra.mxu0 0
        %529 = vmatprep.subr.bf16.mxu0 0
        %530 = vmatpush2.bf16.msra.mxu0 0
        %531 = vmatprep.subr.bf16.mxu0 0
        %532 = vmatpush2.bf16.msra.mxu0 0
        %533 = vmatprep.subr.bf16.mxu0 0
        %534 = vmatpush2.bf16.msra.mxu0 0
        %535 = vmatprep.subr.bf16.mxu0 0
        %536 = vmatpush2.bf16.msra.mxu0 0
        %537 = vmatprep.mubr.bf16.mxu0 0
        %538 = vmatmul.mubr.bf16.gmra.mxu0 %v503
        %v539 = vpop.f32.mrf.mxu0
        %v540 = vadd.f32 0.0, %v539
        %v541 = vpop.f32.mrf.mxu0
        %v542 = vpop.f32.mrf.mxu0
        %v543 = vpop.f32.mrf.mxu0
        %544 = vdwg.mxu0
        %v545 = vld [vmem:[%s444] sm:$0xf]
        %v546 = vld [vmem:[%s444 + $0x4] sm:$0xf]
        %v547 = vld [vmem:[%s444 + $0x8] sm:$0xf]
        %v548 = vld [vmem:[%s444 + $0xc] sm:$0xf]
        %v553 = vunpack.c.l.b16 %v545
        %v554 = vunpack.c.l.b16 %v546
        %v555 = vunpack.c.l.b16 %v547
        %v556 = vunpack.c.l.b16 %v548
        %v557 = vpack.c.b16 %v554, %v553
        %v558 = vpack.c.b16 %v556, %v555
        %561 = vmatprep.subr.bf16.mxu0 0
        %562 = vmatpush1.bf16.msra.mxu0 0
        %563 = vmatprep.subr.bf16.mxu0 0
        %564 = vmatpush1.bf16.msra.mxu0 0
        %565 = vmatprep.subr.bf16.mxu0 0
        %566 = vmatpush1.bf16.msra.mxu0 0
        %567 = vmatprep.subr.bf16.mxu0 0
        %568 = vmatpush1.bf16.msra.mxu0 0
        %569 = vmatprep.subr.bf16.mxu0 0
        %570 = vmatpush1.bf16.msra.mxu0 0
        %571 = vmatprep.subr.bf16.mxu0 0
        %572 = vmatpush1.bf16.msra.mxu0 0
        %573 = vmatprep.subr.bf16.mxu0 0
        %574 = vmatpush1.bf16.msra.mxu0 %v558
        %575 = vmatprep.subr.bf16.mxu0 0
        %576 = vmatpush1.bf16.msra.mxu0 %v557
        %577 = vmatprep.subr.bf16.mxu0 0
        %578 = vmatpush2.bf16.msra.mxu0 0
        %579 = vmatprep.subr.bf16.mxu0 0
        %580 = vmatpush2.bf16.msra.mxu0 0
        %581 = vmatprep.subr.bf16.mxu0 0
        %582 = vmatpush2.bf16.msra.mxu0 0
        %583 = vmatprep.subr.bf16.mxu0 0
        %584 = vmatpush2.bf16.msra.mxu0 0
        %585 = vmatprep.subr.bf16.mxu0 0
        %586 = vmatpush2.bf16.msra.mxu0 0
        %587 = vmatprep.subr.bf16.mxu0 0
        %588 = vmatpush2.bf16.msra.mxu0 0
        %589 = vmatprep.subr.bf16.mxu0 0
        %590 = vmatpush2.bf16.msra.mxu0 0
        %591 = vmatprep.subr.bf16.mxu0 0
        %592 = vmatpush2.bf16.msra.mxu0 0
        %593 = vmatprep.mubr.bf16.mxu0 0
        %594 = vmatmul.mubr.bf16.gmra.mxu0 %v503
        %v595 = vpop.f32.mrf.mxu0
        %v596 = vadd.f32 0.0, %v595
        %v597 = vpop.f32.mrf.mxu0
        %v598 = vpop.f32.mrf.mxu0
        %v599 = vpop.f32.mrf.mxu0
        %600 = vdwg.mxu0
        %v601 = vld [vmem:[%s449] sm:$0xf]
        %v602 = vld [vmem:[%s449 + $0x4] sm:$0xf]
        %v603 = vld [vmem:[%s449 + $0x8] sm:$0xf]
        %v604 = vld [vmem:[%s449 + $0xc] sm:$0xf]
        %v609 = vunpack.c.l.b16 %v601
        %v610 = vunpack.c.l.b16 %v602
        %v611 = vunpack.c.l.b16 %v603
        %v612 = vunpack.c.l.b16 %v604
        %v613 = vpack.c.b16 %v610, %v609
        %v614 = vpack.c.b16 %v612, %v611
        %617 = vmatprep.subr.bf16.mxu0 0
        %618 = vmatpush1.bf16.msra.mxu0 0
        %619 = vmatprep.subr.bf16.mxu0 0
        %620 = vmatpush1.bf16.msra.mxu0 0
        %621 = vmatprep.subr.bf16.mxu0 0
        %622 = vmatpush1.bf16.msra.mxu0 0
        %623 = vmatprep.subr.bf16.mxu0 0
        %624 = vmatpush1.bf16.msra.mxu0 0
        %625 = vmatprep.subr.bf16.mxu0 0
        %626 = vmatpush1.bf16.msra.mxu0 0
        %627 = vmatprep.subr.bf16.mxu0 0
        %628 = vmatpush1.bf16.msra.mxu0 0
        %629 = vmatprep.subr.bf16.mxu0 0
        %630 = vmatpush1.bf16.msra.mxu0 %v614
        %631 = vmatprep.subr.bf16.mxu0 0
        %632 = vmatpush1.bf16.msra.mxu0 %v613
        %633 = vmatprep.subr.bf16.mxu0 0
        %634 = vmatpush2.bf16.msra.mxu0 0
        %635 = vmatprep.subr.bf16.mxu0 0
        %636 = vmatpush2.bf16.msra.mxu0 0
        %637 = vmatprep.subr.bf16.mxu0 0
        %638 = vmatpush2.bf16.msra.mxu0 0
        %639 = vmatprep.subr.bf16.mxu0 0
        %640 = vmatpush2.bf16.msra.mxu0 0
        %641 = vmatprep.subr.bf16.mxu0 0
        %642 = vmatpush2.bf16.msra.mxu0 0
        %643 = vmatprep.subr.bf16.mxu0 0
        %644 = vmatpush2.bf16.msra.mxu0 0
        %645 = vmatprep.subr.bf16.mxu0 0
        %646 = vmatpush2.bf16.msra.mxu0 0
        %647 = vmatprep.subr.bf16.mxu0 0
        %648 = vmatpush2.bf16.msra.mxu0 0
        %649 = vmatprep.mubr.bf16.mxu0 0
        %650 = vmatmul.mubr.bf16.gmra.mxu0 %v503
        %v651 = vpop.f32.mrf.mxu0
        %v652 = vadd.f32 0.0, %v651
        %v653 = vpop.f32.mrf.mxu0
        %v654 = vpop.f32.mrf.mxu0
        %v655 = vpop.f32.mrf.mxu0
        %656 = vdwg.mxu0
        %v657 = vpack.c.bf16 %v540, %v540
        %v658 = vpack.c.bf16 %v596, %v596
        %v659 = vld [vmem:[#allocation2] sm:$0xff]
        %vm660 = vcmask 64512
        %v662 = vsel %vm660, %v657, 0
        %v665 = vsel %vm660, %v658, 0
        %667 = vmatprep.subr.bf16.mxu0 0
        %668 = vmatpush1.bf16.xpose.msra.mxu0 0
        %669 = vmatprep.subr.bf16.mxu0 0
        %670 = vmatpush1.bf16.xpose.msra.mxu0 0
        %671 = vmatprep.subr.bf16.mxu0 0
        %672 = vmatpush1.bf16.xpose.msra.mxu0 0
        %673 = vmatprep.subr.bf16.mxu0 0
        %674 = vmatpush1.bf16.xpose.msra.mxu0 0
        %675 = vmatprep.subr.bf16.mxu0 0
        %676 = vmatpush1.bf16.xpose.msra.mxu0 0
        %677 = vmatprep.subr.bf16.mxu0 0
        %678 = vmatpush1.bf16.xpose.msra.mxu0 0
        %679 = vmatprep.subr.bf16.mxu0 0
        %680 = vmatpush1.bf16.xpose.msra.mxu0 0
        %681 = vmatprep.subr.bf16.mxu0 0
        %682 = vmatpush1.bf16.xpose.msra.mxu0 %v665
        %683 = vmatprep.subr.bf16.mxu0 0
        %684 = vmatpush2.bf16.xpose.msra.mxu0 0
        %685 = vmatprep.subr.bf16.mxu0 0
        %686 = vmatpush2.bf16.xpose.msra.mxu0 0
        %687 = vmatprep.subr.bf16.mxu0 0
        %688 = vmatpush2.bf16.xpose.msra.mxu0 0
        %689 = vmatprep.subr.bf16.mxu0 0
        %690 = vmatpush2.bf16.xpose.msra.mxu0 0
        %691 = vmatprep.subr.bf16.mxu0 0
        %692 = vmatpush2.bf16.xpose.msra.mxu0 0
        %693 = vmatprep.subr.bf16.mxu0 0
        %694 = vmatpush2.bf16.xpose.msra.mxu0 0
        %695 = vmatprep.subr.bf16.mxu0 0
        %696 = vmatpush2.bf16.xpose.msra.mxu0 0
        %697 = vmatprep.subr.bf16.mxu0 0
        %698 = vmatpush2.bf16.xpose.msra.mxu0 0
        %699 = vmatprep.mubr.bf16.mxu0 0
        %700 = vmatmul.mubr.bf16.gmra.mxu0 %v662
        %v701 = vpop.f32.mrf.mxu0
        %v702 = vadd.f32 %v659, %v701
        %v703 = vpop.f32.mrf.mxu0
        %v704 = vpop.f32.mrf.mxu0
        %v705 = vpop.f32.mrf.mxu0
        %706 = vdwg.mxu0
        %v707 = vsel %vm660, %v702, -inf
        %708 = vmax.xlane.f32.xlu0 %v707
        %v709 = vpop.xlane.xlu0 %708
        %v710 = vsub.f32 %v702, %v709
        %v711 = vmul.f32 %v710, 1.442695
        %v712 = vpow.pop %v711
        %v713 = vsel %vm660, %v712, 0.0
        %714 = vadd.xlane.f32.xlu0 %v713
        %v715 = vpop.xlane.xlu0 %714
        %v716 = vrcp.pop %v715
        %v717 = vmul.f32 %v712, %v716
        %v718 = vld [vmem:[%s460] sm:$0xff]
        %720 = vset.pattern.permute.xlu0 0
        %721 = vperm.xlu0 %720, %v718
        %v722 = vpop.permute.xlu0 %721
        %v724 = vmul.f32 %v717, %v722
        %725 = vst.msk [vmem:[%s430] sm:$0xff] %vm660, %v724
        %v726 = vpack.c.bf16 %v724, %v724
        %v727 = vpack.c.bf16 %v652, %v652
        %v729 = vsel %vm660, %v726, 0
        %vm731 = vcmask 1043456
        %v733 = vsel %vm731, %v727, 0
        %735 = vmatprep.subr.bf16.mxu0 0
        %736 = vmatpush1.bf16.msra.mxu0 0
        %737 = vmatprep.subr.bf16.mxu0 0
        %738 = vmatpush1.bf16.msra.mxu0 0
        %739 = vmatprep.subr.bf16.mxu0 0
        %740 = vmatpush1.bf16.msra.mxu0 0
        %741 = vmatprep.subr.bf16.mxu0 0
        %742 = vmatpush1.bf16.msra.mxu0 0
        %743 = vmatprep.subr.bf16.mxu0 0
        %744 = vmatpush1.bf16.msra.mxu0 0
        %745 = vmatprep.subr.bf16.mxu0 0
        %746 = vmatpush1.bf16.msra.mxu0 0
        %747 = vmatprep.subr.bf16.mxu0 0
        %748 = vmatpush1.bf16.msra.mxu0 0
        %749 = vmatprep.subr.bf16.mxu0 0
        %750 = vmatpush1.bf16.msra.mxu0 %v733
        %751 = vmatprep.subr.bf16.mxu0 0
        %752 = vmatpush2.bf16.msra.mxu0 0
        %753 = vmatprep.subr.bf16.mxu0 0
        %754 = vmatpush2.bf16.msra.mxu0 0
        %755 = vmatprep.subr.bf16.mxu0 0
        %756 = vmatpush2.bf16.msra.mxu0 0
        %757 = vmatprep.subr.bf16.mxu0 0
        %758 = vmatpush2.bf16.msra.mxu0 0
        %759 = vmatprep.subr.bf16.mxu0 0
        %760 = vmatpush2.bf16.msra.mxu0 0
        %761 = vmatprep.subr.bf16.mxu0 0
        %762 = vmatpush2.bf16.msra.mxu0 0
        %763 = vmatprep.subr.bf16.mxu0 0
        %764 = vmatpush2.bf16.msra.mxu0 0
        %765 = vmatprep.subr.bf16.mxu0 0
        %766 = vmatpush2.bf16.msra.mxu0 0
        %767 = vmatprep.mubr.bf16.mxu0 0
        %768 = vmatmul.mubr.bf16.gmra.mxu0 %v729
        %v769 = vpop.f32.mrf.mxu0
        %v770 = vadd.f32 0.0, %v769
        %v771 = vpop.f32.mrf.mxu0
        %v772 = vpop.f32.mrf.mxu0
        %v773 = vpop.f32.mrf.mxu0
        %774 = vdwg.mxu0
        %v775 = vpack.c.bf16 %v770, %v770
        %v776 = vld [vmem:[%s453] sm:$0xf]
        %v778 = vsel %vm660, %v775, 0
        %v781 = vsel %vm731, %v776, 0
        %783 = vmatprep.subr.bf16.mxu0 0
        %784 = vmatpush1.bf16.msra.mxu0 0
        %785 = vmatprep.subr.bf16.mxu0 0
        %786 = vmatpush1.bf16.msra.mxu0 0
        %787 = vmatprep.subr.bf16.mxu0 0
        %788 = vmatpush1.bf16.msra.mxu0 0
        %789 = vmatprep.subr.bf16.mxu0 0
        %790 = vmatpush1.bf16.msra.mxu0 0
        %791 = vmatprep.subr.bf16.mxu0 0
        %792 = vmatpush1.bf16.msra.mxu0 0
        %793 = vmatprep.subr.bf16.mxu0 0
        %794 = vmatpush1.bf16.msra.mxu0 0
        %795 = vmatprep.subr.bf16.mxu0 0
        %796 = vmatpush1.bf16.msra.mxu0 0
        %797 = vmatprep.subr.bf16.mxu0 0
        %798 = vmatpush1.bf16.msra.mxu0 %v781
        %799 = vmatprep.subr.bf16.mxu0 0
        %800 = vmatpush2.bf16.msra.mxu0 0
        %801 = vmatprep.subr.bf16.mxu0 0
        %802 = vmatpush2.bf16.msra.mxu0 0
        %803 = vmatprep.subr.bf16.mxu0 0
        %804 = vmatpush2.bf16.msra.mxu0 0
        %805 = vmatprep.subr.bf16.mxu0 0
        %806 = vmatpush2.bf16.msra.mxu0 0
        %807 = vmatprep.subr.bf16.mxu0 0
        %808 = vmatpush2.bf16.msra.mxu0 0
        %809 = vmatprep.subr.bf16.mxu0 0
        %810 = vmatpush2.bf16.msra.mxu0 0
        %811 = vmatprep.subr.bf16.mxu0 0
        %812 = vmatpush2.bf16.msra.mxu0 0
        %813 = vmatprep.subr.bf16.mxu0 0
        %814 = vmatpush2.bf16.msra.mxu0 0
        %815 = vmatprep.mubr.bf16.mxu0 0
        %816 = vmatmul.mubr.bf16.gmra.mxu0 %v778
        %v817 = vpop.f32.mrf.mxu0
        %v818 = vadd.f32 0.0, %v817
        %v819 = vpop.f32.mrf.mxu0
        %v820 = vpop.f32.mrf.mxu0
        %v821 = vpop.f32.mrf.mxu0
        %822 = vdwg.mxu0
        // Predicated region
        $region57: #{tpu_custom_call.1} parent=51 // pred_check
          %p823 = pneg %p462
        $region58: #{tpu_custom_call.1} parent=51 // pred_check_branch
          %825 = sbr.rel (%p823) target = $region60
        $region59: #{tpu_custom_call.1} parent=51 // pred_region
          %v826 = vld [vmem:[%s5] sm:$0x1]
          %v828 = vlaneseq
          %v829 = vshrl.u32 %v828, 7
          %v830 = vsub.s32 0, %v829
          %v831 = vrot.slane %v826, %v830
          %v833 = vadd.f32 %v831, %v818
          %834 = vst.msk [vmem:[%s423] sm:$0xff] %vm501, %v833
        $region60: #{tpu_custom_call.1} parent=51 // pred_fallthru
          _
        %p835 = scmp.ne.s32.totalorder %s32, 0
        // Predicated region
        $region61: #{tpu_custom_call.1} parent=51 // pred_check
          %p836 = pneg %p835
        $region62: #{tpu_custom_call.1} parent=51 // pred_check_branch
          %838 = sbr.rel (%p836) target = $region64
        $region63: #{tpu_custom_call.1} parent=51 // pred_region
          %v839 = vld [vmem:[%s423] sm:$0xff]
          %v840 = vadd.f32 %v839, %v818
          %841 = vst.msk [vmem:[%s423] sm:$0xff] %vm501, %v840
        $region64: #{tpu_custom_call.1} parent=51 // pred_fallthru
          _
        %s842 = sand.u32 %s250, 1
        %s843 = scalar_lea.sflag [#allocation4], %s842
        %s844 = sand.u32 %s250, 1
        %s845 = smul.addr %s844, 8
        %s846 = scalar_lea.vmem [#allocation3], %s845
        %s847 = sand.u32 %s278, 1
        %s848 = scalar_lea.sflag [#allocation6], %s847
        %s849 = sand.u32 %s278, 1
        %s850 = smul.addr %s849, 8
        %s851 = scalar_lea.vmem [#allocation5], %s850
        // Predicated region
        $region65: #{tpu_custom_call.1} parent=51 // pred_check
          %p852 = pneg %p260
        $region66: #{tpu_custom_call.1} parent=51 // pred_check_branch
          %854 = sbr.rel (%p852) target = $region68
        $region67: #{tpu_custom_call.1} parent=51 // pred_region
          %s856 = ssub.s32 128, 128
          %857 = vsyncadd %s843, %s856
          %s858 = smul.addr %s31, 128
          %s859 = scalar_lea.hbm %s8, %s858
          %s861 = sshll.u32 %s846, 4
          %s862 = int_to_ptr.vmem [resolvable:$true] %s861
          %864 = dma.vmem_to_hbm [thread:$0]  %s862, 128, %s859, %s843
        $region68: #{tpu_custom_call.1} parent=51 // pred_fallthru
          _
        // Predicated region
        $region69: #{tpu_custom_call.1} parent=51 // pred_check
          %p865 = pneg %p288
        $region70: #{tpu_custom_call.1} parent=51 // pred_check_branch
          %867 = sbr.rel (%p865) target = $region72
        $region71: #{tpu_custom_call.1} parent=51 // pred_region
          %s869 = ssub.s32 128, 128
          %870 = vsyncadd %s848, %s869
          %s871 = smul.addr %s31, 4
          %s872 = sadd.s32 %s32, %s871
          %s873 = smul.addr %s872, 128
          %s874 = scalar_lea.hbm %s9, %s873
          %s876 = sshll.u32 %s851, 4
          %s877 = int_to_ptr.vmem [resolvable:$true] %s876
          %879 = dma.vmem_to_hbm [thread:$0]  %s877, 128, %s874, %s848
        $region72: #{tpu_custom_call.1} parent=51 // pred_fallthru
          _
      $region52: #{tpu_custom_call.1} parent=5 // pred_fallthru
        _
      %p880 = scmp.le.s32.totalorder 2, %s22
      // Predicated region
      $region73: #{tpu_custom_call.1} parent=5 // pred_check
        %p881 = pneg %p880
      $region74: #{tpu_custom_call.1} parent=5 // pred_check_branch
        %883 = sbr.rel (%p881) target = $region76
      $region75: #{tpu_custom_call.1} parent=5 // pred_region
        %s884 = ssub.s32 %s22, 2
        // Predicated region
        $region77: #{tpu_custom_call.1} parent=75 // pred_check
          %p885 = pneg %p266
        $region78: #{tpu_custom_call.1} parent=75 // pred_check_branch
          %887 = sbr.rel (%p885) target = $region80
        $region79: #{tpu_custom_call.1} parent=75 // pred_region
          %s888 = sand.u32 %s251, 1
          %s889 = scalar_lea.sflag [#allocation4], %s888
          %s890 = sand.u32 %s251, 1
          %s891 = smul.addr %s890, 8
          %s892 = scalar_lea.vmem [#allocation3], %s891
          %893 = dma.done %s889, 128
        $region80: #{tpu_custom_call.1} parent=75 // pred_fallthru
          _
        // Predicated region
        $region81: #{tpu_custom_call.1} parent=75 // pred_check
          %p894 = pneg %p294
        $region82: #{tpu_custom_call.1} parent=75 // pred_check_branch
          %896 = sbr.rel (%p894) target = $region84
        $region83: #{tpu_custom_call.1} parent=75 // pred_region
          %s897 = sand.u32 %s279, 1
          %s898 = scalar_lea.sflag [#allocation6], %s897
          %s899 = sand.u32 %s279, 1
          %s900 = smul.addr %s899, 8
          %s901 = scalar_lea.vmem [#allocation5], %s900
          %902 = dma.done %s898, 128
        $region84: #{tpu_custom_call.1} parent=75 // pred_fallthru
          _
      $region76: #{tpu_custom_call.1} parent=5 // pred_fallthru
        _
    $region6: #{tpu_custom_call.1} parent=1 // loop_footer
      %s26 = sadd.s32 1, %s22
    $region7: #{tpu_custom_call.1} parent=1 // loop_footer_branch
      %21 = sbr.rel target = $region3
    $region8: #{tpu_custom_call.1} parent=1 // loop_exit
      _
    %903 = vsyncpa [#allocation4], 1
    %s904 = scalar_lea.sflag [#allocation4], 1
    %905 = vsyncpa %s904, 1
    %906 = vsyncpa [#allocation6], 1
    %s907 = scalar_lea.sflag [#allocation6], 1
    %908 = vsyncpa %s907, 1

</llo_original>
